<compile_context>
chip_gen: v6e
topology: v6e:2x2x1
jax: 0.10.0
libtpu: 0.0.40
codegen_flags: <defaults>
</compile_context>

<pallas_src>
import jax
import jax.numpy as jnp
from jax import lax
from jax.experimental import pallas as pl
from jax.experimental.pallas import tpu as pltpu


_BLOCK_ROWS = 512  # row tile for the large-batch (gridded) path


def _round_up(x, m):
    return ((x + m - 1) // m) * m


# --------------------------------- kernel ------------------------------------

def _embed_kernel(idx_ref, dense_ref, w_ref, out_ref):
    """feat(R,Fp) @ W(Fp,OUTp): one-hot built in-kernel with a shared iota.

    idx_ref   : (R, 3) int32  absolute feature-lane positions (label, k0, k1);
                -1 => no one-hot contribution.
    dense_ref : (R, Fp) f32   shapes / bias values / node-type indicators,
                already at their target lane offsets (wrapper plumbing).
    w_ref     : (Fp, OUTp) f32 block-stacked weights (biases folded in).
    out_ref   : (R, OUTp) f32  lane-dense output slab (OUTp multiple of 128).
    """
    rows, fp = dense_ref.shape
    iota = lax.broadcasted_iota(jnp.int32, (rows, fp), 1)
    idx = idx_ref[...]
    onehot = ((iota == idx[:, 0:1]) | (iota == idx[:, 1:2]) |
              (iota == idx[:, 2:3])).astype(jnp.float32)
    feat = dense_ref[...] + onehot
    out_ref[...] = jnp.dot(feat, w_ref[...], preferred_element_type=jnp.float32)


# ----------------------------- parameter stacking -----------------------------

def build_stacked_params(params):
    """Block-stack all module parameters into ONE (Fpad, 128) weight slab.

    Feature-lane layout (shared by both node types; each type only populates
    its own columns):
      [0:L)                weighted label one-hot
      [L:L+nsv)            weighted shape values
      [.. :+K)             kernel-0 one-hot
      [.. :+K)             kernel-1 one-hot
      [.. :+2)             weighted bias values
      [f_w : f_w+L)        regular label one-hot
      [.. :+nsv)           regular shape values
      col_wone             weighted-node constant-1 (folds shape_b + bias_b)
      col_rone             regular-node constant-1 (folds shape_b)
    """
    reg_tab = params["regular_table"].astype(jnp.float32)   # (L, e_r)
    w_tab = params["weighted_table"].astype(jnp.float32)    # (L, e_w)
    k_tab = params["kernel_table"].astype(jnp.float32)      # (K, ke2)
    sw = params["shape_w"].astype(jnp.float32)               # (nsv, s)
    sb = params["shape_b"].astype(jnp.float32)                # (1, s)
    bw = params["bias_w"].astype(jnp.float32)                  # (2, bsz)
    bb = params["bias_b"].astype(jnp.float32)                  # (1, bsz)

    n_labels, e_w = w_tab.shape
    e_r = reg_tab.shape[1]
    n_kernels, ke2 = k_tab.shape
    nsv, s = sw.shape
    n_bias_in, bsz = bw.shape

    out_dim = e_w + s + 2 * ke2 + bsz
    assert out_dim == e_r + s, "regular / weighted output widths must match"

    off_wshape = n_labels
    off_k0 = off_wshape + nsv
    off_k1 = off_k0 + n_kernels
    off_bias = off_k1 + n_kernels
    f_w = off_bias + n_bias_in
    off_rlab = f_w
    off_rshape = off_rlab + n_labels
    f_r = n_labels + nsv
    col_wone = f_w + f_r
    col_rone = col_wone + 1
    n_feat = col_rone + 1
    f_pad = _round_up(n_feat, 128)
    out_pad = _round_up(out_dim, 128)

    w = jnp.zeros((f_pad, out_pad), jnp.float32)
    # weighted node feature rows
    w = w.at[0:n_labels, 0:e_w].set(w_tab)
    w = w.at[off_wshape:off_wshape + nsv, e_w:e_w + s].set(sw)
    w = w.at[off_k0:off_k0 + n_kernels, e_w + s:e_w + s + ke2].set(k_tab)
    w = w.at[off_k1:off_k1 + n_kernels,
             e_w + s + ke2:e_w + s + 2 * ke2].set(k_tab)
    w = w.at[off_bias:off_bias + n_bias_in,
             e_w + s + 2 * ke2:out_dim].set(bw)
    # regular node feature rows
    w = w.at[off_rlab:off_rlab + n_labels, 0:e_r].set(reg_tab)
    w = w.at[off_rshape:off_rshape + nsv, e_r:out_dim].set(sw)
    # folded biases (selected by the per-row indicator columns)
    w = w.at[col_wone, e_w:e_w + s].set(sb[0])
    w = w.at[col_wone, e_w + s + 2 * ke2:out_dim].set(bb[0])
    w = w.at[col_rone, e_r:out_dim].set(sb[0])

    return dict(
        W=w, out_dim=out_dim, out_pad=out_pad, f_pad=f_pad,
        n_shape_vals=nsv, n_bias_in=n_bias_in,
        off_wshape=off_wshape, off_k0=off_k0, off_k1=off_k1,
        off_bias=off_bias, off_rlab=off_rlab, off_rshape=off_rshape,
        col_wone=col_wone, col_rone=col_rone)


# ----------------------------- input packing (jitted) -------------------------

def _pack_weighted(st, inds, shapes, kernels, bias):
    b, n = inds.shape
    nsv = st["n_shape_vals"]
    inds = inds.astype(jnp.int32)
    kernels = kernels.astype(jnp.int32)
    idx = jnp.concatenate(
        [inds[..., None],
         st["off_k0"] + kernels[..., 0:1],
         st["off_k1"] + kernels[..., 1:2]], axis=-1)               # (B,N,3)

    def zeros(w):
        return jnp.zeros((b, n, w), jnp.float32)

    dense = jnp.concatenate(
        [zeros(st["off_wshape"]),
         shapes.astype(jnp.float32),
         zeros(st["off_bias"] - (st["off_wshape"] + nsv)),
         bias.astype(jnp.float32),
         zeros(st["col_wone"] - st["off_bias"] - st["n_bias_in"]),
         jnp.ones((b, n, 1), jnp.float32),
         zeros(st["f_pad"] - st["col_wone"] - 1)], axis=-1)        # (B,N,Fpad)
    return idx, dense


def _pack_regular(st, inds, shapes):
    b, n = inds.shape
    nsv = st["n_shape_vals"]
    inds = inds.astype(jnp.int32)
    idx = jnp.concatenate(
        [st["off_rlab"] + inds[..., None],
         jnp.full((b, n, 2), -1, jnp.int32)], axis=-1)             # (B,N,3)

    def zeros(w):
        return jnp.zeros((b, n, w), jnp.float32)

    dense = jnp.concatenate(
        [zeros(st["off_rshape"]),
         shapes.astype(jnp.float32),
         zeros(st["col_rone"] - st["off_rshape"] - nsv),
         jnp.ones((b, n, 1), jnp.float32),
         zeros(st["f_pad"] - st["col_rone"] - 1)], axis=-1)        # (B,N,Fpad)
    return idx, dense


# ----------------------------- pallas_call wrapper -----------------------------

def _run_kernel(st, idx, dense):
    rows = idx.shape[0]
    f_pad, out_pad = st["f_pad"], st["out_pad"]
    out_shape = jax.ShapeDtypeStruct((rows, out_pad), jnp.float32)

    if rows <= _BLOCK_ROWS:
        # Tiny-input path: grid-less, 3 operand DMAs, everything resident.
        return pl.pallas_call(_embed_kernel, out_shape=out_shape)(
            idx, dense, st["W"])

    # Large-batch path: 1-D parallel row grid (rows is a multiple of
    # _BLOCK_ROWS by construction) -> uses both v7x TensorCores, pipelines DMA.
    grid = (rows // _BLOCK_ROWS,)
    return pl.pallas_call(
        _embed_kernel,
        out_shape=out_shape,
        grid_spec=pltpu.PrefetchScalarGridSpec(
            num_scalar_prefetch=0,
            grid=grid,
            in_specs=[
                pl.BlockSpec((_BLOCK_ROWS, 3), lambda i: (i, 0)),
                pl.BlockSpec((_BLOCK_ROWS, f_pad), lambda i: (i, 0)),
                pl.BlockSpec((f_pad, out_pad), lambda i: (0, 0)),
            ],
            out_specs=pl.BlockSpec((_BLOCK_ROWS, out_pad), lambda i: (i, 0))),
        compiler_params=pltpu.CompilerParams(
            dimension_semantics=("parallel",)),
    )(idx, dense, st["W"])


# ----------------------------- public module-like API -------------------------

def make_cg_node_embedding(params):
    """Returns a jitted forward fn; parameter stacking happens ONCE here."""
    st = build_stacked_params(params)

    def forward(regular_node_inds, regular_node_shapes,
                weighted_node_inds, weighted_node_shapes,
                weighted_node_kernels, weighted_node_bias):
        has_r = regular_node_inds is not None
        has_w = weighted_node_inds is not None
        if not (has_r or has_w):
            raise ValueError("Input to CGNodeEmbedding cannot both be None")

        idx_parts, dense_parts = [], []
        if has_w:  # weighted nodes first (matches torch.cat([w, r], dim=1))
            iw, dw = _pack_weighted(st, weighted_node_inds, weighted_node_shapes,
                                    weighted_node_kernels, weighted_node_bias)
            idx_parts.append(iw)
            dense_parts.append(dw)
        if has_r:
            ir, dr = _pack_regular(st, regular_node_inds, regular_node_shapes)
            idx_parts.append(ir)
            dense_parts.append(dr)

        idx = (jnp.concatenate(idx_parts, axis=1)
               if len(idx_parts) > 1 else idx_parts[0])
        dense = (jnp.concatenate(dense_parts, axis=1)
                 if len(dense_parts) > 1 else dense_parts[0])

        b, n_total = idx.shape[:2]
        rows = b * n_total
        rows_pad = (_round_up(rows, _BLOCK_ROWS) if rows > _BLOCK_ROWS
                    else _round_up(rows, 8))

        idx = idx.reshape(rows, 3)
        dense = dense.reshape(rows, st["f_pad"])
        if rows_pad != rows:
            idx = jnp.concatenate(
                [idx, jnp.full((rows_pad - rows, 3), -1, jnp.int32)], axis=0)
            dense = jnp.concatenate(
                [dense,
                 jnp.zeros((rows_pad - rows, st["f_pad"]), jnp.float32)],
                axis=0)

        out = _run_kernel(st, idx, dense)
        # Lane-dense (rows_pad, 128) slab -> (B, N, out_embed_size).
        return out[:rows, :st["out_dim"]].reshape(b, n_total, st["out_dim"])

    return jax.jit(forward)


# ----------------------------- reference (pure JAX) ---------------------------

def _reference(params, ri, rs, wi, ws, wk, wb):
    reg = jnp.take(params["regular_table"], ri, axis=0)
    reg_shape = rs @ params["shape_w"] + params["shape_b"][0]
    reg_emb = jnp.concatenate([reg, reg_shape], axis=-1)

    we = jnp.take(params["weighted_table"], wi, axis=0)
    kemb = jnp.take(params["kernel_table"], wk, axis=0)           # (B,N,2,ke//2)
    kemb = kemb.reshape(kemb.shape[0], kemb.shape[1], -1)
    w_shape = ws @ params["shape_w"] + params["shape_b"][0]
    b_emb = wb @ params["bias_w"] + params["bias_b"][0]
    w_emb = jnp.concatenate([we, w_shape, kemb, b_emb], axis=-1)
    return jnp.concatenate([w_emb, reg_emb], axis=1)


# ----------------------------- main -------------------------------------------

if __name__ == "__main__":
    # Module hyperparameters (small, consistent with __init__ asserts)
    n_unique_labels = 16
    out_embed_size = 32
    shape_embed_size = 8
    kernel_embed_size = 8          # must be even
    bias_embed_size = 2
    n_unique_kernels = 8
    n_shape_vals = 6

    regular_out = out_embed_size - shape_embed_size
    weighted_out = (out_embed_size - shape_embed_size
                    - kernel_embed_size - bias_embed_size)

    key = jax.random.PRNGKey(0)
    ks = jax.random.split(key, 12)

    params = {
        "regular_table": jax.random.normal(ks[0], (n_unique_labels, regular_out), jnp.float32),
        "weighted_table": jax.random.normal(ks[1], (n_unique_labels, weighted_out), jnp.float32),
        "kernel_table": jax.random.normal(ks[2], (n_unique_kernels, kernel_embed_size // 2), jnp.float32),
        "shape_w": jax.random.normal(ks[3], (n_shape_vals, shape_embed_size), jnp.float32) * 0.1,
        "shape_b": jax.random.normal(ks[4], (1, shape_embed_size), jnp.float32) * 0.1,
        "bias_w": jax.random.normal(ks[5], (2, bias_embed_size), jnp.float32) * 0.1,
        "bias_b": jax.random.normal(ks[6], (1, bias_embed_size), jnp.float32) * 0.1,
    }

    fwd = make_cg_node_embedding(params)   # params stacked once, outside calls

    # ---- small case: grid-less path --------------------------------------
    B, N_r, N_w = 2, 8, 8
    regular_node_inds = jax.random.randint(ks[7], (B, N_r), 0, n_unique_labels, jnp.int32)
    regular_node_shapes = jax.random.normal(ks[8], (B, N_r, n_shape_vals), jnp.float32)
    weighted_node_inds = jax.random.randint(ks[9], (B, N_w), 0, n_unique_labels, jnp.int32)
    weighted_node_shapes = jax.random.normal(ks[10], (B, N_w, n_shape_vals), jnp.float32)
    weighted_node_kernels = jax.random.randint(ks[11], (B, N_w, 2), 0, n_unique_kernels, jnp.int32)
    weighted_node_bias = jax.random.normal(jax.random.PRNGKey(42), (B, N_w, 2), jnp.float32)

    out = fwd(regular_node_inds, regular_node_shapes,
              weighted_node_inds, weighted_node_shapes,
              weighted_node_kernels, weighted_node_bias)
    out = jax.block_until_ready(out)

    ref = _reference(params,
                     regular_node_inds, regular_node_shapes,
                     weighted_node_inds, weighted_node_shapes,
                     weighted_node_kernels, weighted_node_bias)
    assert out.shape == (B, N_w + N_r, out_embed_size), out.shape
    assert jnp.allclose(out, ref, atol=1e-4, rtol=1e-4), "mismatch vs pure-JAX reference"

    # single-branch paths of the module
    w_only = fwd(None, None,
                 weighted_node_inds, weighted_node_shapes,
                 weighted_node_kernels, weighted_node_bias)
    r_only = fwd(regular_node_inds, regular_node_shapes,
                 None, None, None, None)
    jax.block_until_ready((w_only, r_only))
    assert jnp.allclose(w_only, ref[:, :N_w], atol=1e-4, rtol=1e-4), "weighted-only mismatch"
    assert jnp.allclose(r_only, ref[:, N_w:], atol=1e-4, rtol=1e-4), "regular-only mismatch"

    # ---- larger case: exercises the 1-D parallel row-grid path -----------
    B2, N_w2, N_r2 = 8, 72, 56   # B2*(N_w2+N_r2) = 1024 rows > _BLOCK_ROWS
    k2 = jax.random.split(jax.random.PRNGKey(1), 6)
    ri2 = jax.random.randint(k2[0], (B2, N_r2), 0, n_unique_labels, jnp.int32)
    rs2 = jax.random.normal(k2[1], (B2, N_r2, n_shape_vals), jnp.float32)
    wi2 = jax.random.randint(k2[2], (B2, N_w2), 0, n_unique_labels, jnp.int32)
    ws2 = jax.random.normal(k2[3], (B2, N_w2, n_shape_vals), jnp.float32)
    wk2 = jax.random.randint(k2[4], (B2, N_w2, 2), 0, n_unique_kernels, jnp.int32)
    wb2 = jax.random.normal(k2[5], (B2, N_w2, 2), jnp.float32)

    out2 = fwd(ri2, rs2, wi2, ws2, wk2, wb2)
    out2 = jax.block_until_ready(out2)
    ref2 = _reference(params, ri2, rs2, wi2, ws2, wk2, wb2)
    assert out2.shape == (B2, N_w2 + N_r2, out_embed_size), out2.shape
    assert jnp.allclose(out2, ref2, atol=1e-4, rtol=1e-4), "gridded-path mismatch"

    print("KERNEL_OK")
</pallas_src>

<mosaic_0001>
module attributes {stable_mosaic.version = 11 : i64} {
  func.func @_embed_kernel(%arg0: memref<32x3xi32, #tpu.memory_space<vmem>>, %arg1: memref<32x128xf32, #tpu.memory_space<vmem>>, %arg2: memref<128x128xf32, #tpu.memory_space<vmem>>, %arg3: memref<32x128xf32, #tpu.memory_space<vmem>>) attributes {dimension_semantics = [], scalar_prefetch = 0 : i64, scratch_operands = 0 : i64, tpu.core_type = #tpu.core_type<tc>} {
    %0 = tpu.iota {dimensions = array<i32: 1>} : vector<32x128xi32>
    %c0 = arith.constant 0 : index
    %c0_0 = arith.constant 0 : index
    %1 = vector.load %arg0[%c0, %c0_0] : memref<32x3xi32, #tpu.memory_space<vmem>>, vector<32x3xi32>
    %2 = vector.extract_strided_slice %1 {offsets = [0, 0], sizes = [32, 1], strides = [1, 1]} : vector<32x3xi32> to vector<32x1xi32>
    %3 = vector.broadcast %2 : vector<32x1xi32> to vector<32x128xi32>
    %4 = arith.cmpi eq, %0, %3 : vector<32x128xi32>
    %5 = vector.extract_strided_slice %1 {offsets = [0, 1], sizes = [32, 1], strides = [1, 1]} : vector<32x3xi32> to vector<32x1xi32>
    %6 = vector.broadcast %5 : vector<32x1xi32> to vector<32x128xi32>
    %7 = arith.cmpi eq, %0, %6 : vector<32x128xi32>
    %8 = arith.ori %4, %7 : vector<32x128xi1>
    %9 = vector.extract_strided_slice %1 {offsets = [0, 2], sizes = [32, 1], strides = [1, 1]} : vector<32x3xi32> to vector<32x1xi32>
    %10 = vector.broadcast %9 : vector<32x1xi32> to vector<32x128xi32>
    %11 = arith.cmpi eq, %0, %10 : vector<32x128xi32>
    %12 = arith.ori %8, %11 : vector<32x128xi1>
    %13 = arith.extui %12 : vector<32x128xi1> to vector<32x128xi32>
    %14 = arith.sitofp %13 : vector<32x128xi32> to vector<32x128xf32>
    %c0_1 = arith.constant 0 : index
    %c0_2 = arith.constant 0 : index
    %15 = vector.load %arg1[%c0_1, %c0_2] : memref<32x128xf32, #tpu.memory_space<vmem>>, vector<32x128xf32>
    %16 = arith.addf %15, %14 : vector<32x128xf32>
    %c0_3 = arith.constant 0 : index
    %c0_4 = arith.constant 0 : index
    %17 = vector.load %arg2[%c0_3, %c0_4] : memref<128x128xf32, #tpu.memory_space<vmem>>, vector<128x128xf32>
    %cst = arith.constant dense<0.000000e+00> : vector<32x128xf32>
    %18 = tpu.matmul %16, %17, %cst {dimension_numbers = #tpu.dot_dimension_numbers<[1], [0], [0], [1], [0, 0, 1, 1], [], []>} : vector<32x128xf32>, vector<128x128xf32>, vector<32x128xf32> -> vector<32x128xf32>
    %c0_5 = arith.constant 0 : index
    %c0_6 = arith.constant 0 : index
    %19 = vector.load %arg3[%c0_5, %c0_6] : memref<32x128xf32, #tpu.memory_space<vmem>>, vector<32x128xf32>
    tpu.vector_store %arg3[%c0_5, %c0_6], %18 {strides = array<i32>} : memref<32x128xf32, #tpu.memory_space<vmem>>, vector<32x128xf32>,
    return
  }
}

</mosaic_0001>

<llo_original>
// kernel: forward.1
$region0: #{forward.1}
  #allocation0 [shape = 'u32[]', space=smem, size = 0x4, offset = 0x4, fixed_abs, tag = 'smem constant byte address 0x4 - core index']
  #allocation1 [shape = 'u32[144,128]{1,0:T(1,128)}', space=vmem, size = 0x12000, scoped, tag = 'internal scratch']
  %s0 = inlined_call_operand.vmem [shape: s32[32,3], index: 0, kind: input, shape index: {}]
  %s1 = inlined_call_operand.vmem [shape: f32[32,128], index: 1, kind: input, shape index: {}]
  %s2 = inlined_call_operand.vmem [shape: f32[128,128], index: 2, kind: input, shape index: {}]
  %s3 = inlined_call_operand.hbm [shape: f32[32,128], index: 3, kind: output, shape index: {}]
  %s4 = sld [smem:[#allocation0]]
  $region22: #{forward.1} parent=0
    _
  %s6 = ssub.s32 1, %s4
  %s7 = scalar_select 0, %s6, %s4
  $region1: #{forward.1} parent=0
    #allocation2 [shape = 'u8[16384]{0}', space=vmem, size = 0x4000, scoped, tag = 'output window, operand 0, single buffered']
    #allocation3 [shape = 's32[1]{0}', space=sflag, size = 0x4, scoped, tag = 'scoped memory for forward.1']
    %8 = vsyncpa [#allocation3], 0
    // Predicated region
    $region2: #{forward.1} parent=1 // pred_check
      _
    $region3: #{forward.1} parent=1 // pred_check_branch
      %10 = sbr.rel (0) target = $region5
    $region4: #{forward.1} parent=1 // pred_region
      _
    $region5: #{forward.1} parent=1 // pred_fallthru
      _
    // Predicated region
    $region6: #{forward.1} parent=1 // pred_check
      _
    $region7: #{forward.1} parent=1 // pred_check_branch
      %12 = sbr.rel (0) target = $region9
    $region8: #{forward.1} parent=1 // pred_region
      _
    $region9: #{forward.1} parent=1 // pred_fallthru
      _
    // Predicated region
    $region10: #{forward.1} parent=1 // pred_check
      _
    $region11: #{forward.1} parent=1 // pred_check_branch
      %14 = sbr.rel (0) target = $region13
    $region12: #{forward.1} parent=1 // pred_region
      _
    $region13: #{forward.1} parent=1 // pred_fallthru
      _
    %v15 = vlaneseq
    %v16 = vand.u32 %v15, 127
    %v17 = vld [vmem:[%s0] sm:$0xff]
    %v18 = vld [vmem:[%s0 + $0x8] sm:$0xff]
    %v19 = vld [vmem:[%s0 + $0x10] sm:$0xff]
    %v20 = vld [vmem:[%s0 + $0x18] sm:$0xff]
    %21 = vset.pattern.permute.xlu0 0
    %22 = vperm.xlu0 %21, %v17
    %v23 = vpop.permute.xlu0 %22
    %24 = vset.pattern.permute.xlu0 0
    %25 = vperm.xlu0 %24, %v18
    %v26 = vpop.permute.xlu0 %25
    %27 = vset.pattern.permute.xlu0 0
    %28 = vperm.xlu0 %27, %v19
    %v29 = vpop.permute.xlu0 %28
    %30 = vset.pattern.permute.xlu0 0
    %31 = vperm.xlu0 %30, %v20
    %v32 = vpop.permute.xlu0 %31
    %vm33 = vcmp.eq.s32.totalorder %v16, %v23
    %vm34 = vcmp.eq.s32.totalorder %v16, %v26
    %vm35 = vcmp.eq.s32.totalorder %v16, %v29
    %vm36 = vcmp.eq.s32.totalorder %v16, %v32
    %37 = vset.pattern.permute.xlu0 1
    %38 = vperm.xlu0 %37, %v17
    %v39 = vpop.permute.xlu0 %38
    %40 = vset.pattern.permute.xlu0 1
    %41 = vperm.xlu0 %40, %v18
    %v42 = vpop.permute.xlu0 %41
    %43 = vset.pattern.permute.xlu0 1
    %44 = vperm.xlu0 %43, %v19
    %v45 = vpop.permute.xlu0 %44
    %46 = vset.pattern.permute.xlu0 1
    %47 = vperm.xlu0 %46, %v20
    %v48 = vpop.permute.xlu0 %47
    %vm49 = vcmp.eq.s32.totalorder %v16, %v39
    %vm50 = vcmp.eq.s32.totalorder %v16, %v42
    %vm51 = vcmp.eq.s32.totalorder %v16, %v45
    %vm52 = vcmp.eq.s32.totalorder %v16, %v48
    %vm53 = vmor %vm33, %vm49
    %vm54 = vmor %vm34, %vm50
    %vm55 = vmor %vm35, %vm51
    %vm56 = vmor %vm36, %vm52
    %57 = vset.pattern.permute.xlu0 2
    %58 = vperm.xlu0 %57, %v17
    %v59 = vpop.permute.xlu0 %58
    %60 = vset.pattern.permute.xlu0 2
    %61 = vperm.xlu0 %60, %v18
    %v62 = vpop.permute.xlu0 %61
    %63 = vset.pattern.permute.xlu0 2
    %64 = vperm.xlu0 %63, %v19
    %v65 = vpop.permute.xlu0 %64
    %66 = vset.pattern.permute.xlu0 2
    %67 = vperm.xlu0 %66, %v20
    %v68 = vpop.permute.xlu0 %67
    %vm69 = vcmp.eq.s32.totalorder %v16, %v59
    %vm70 = vcmp.eq.s32.totalorder %v16, %v62
    %vm71 = vcmp.eq.s32.totalorder %v16, %v65
    %vm72 = vcmp.eq.s32.totalorder %v16, %v68
    %vm73 = vmor %vm53, %vm69
    %vm74 = vmor %vm54, %vm70
    %vm75 = vmor %vm55, %vm71
    %vm76 = vmor %vm56, %vm72
    %v77 = vsel %vm73, 1, 0
    %v78 = vsel %vm74, 1, 0
    %v79 = vsel %vm75, 1, 0
    %v80 = vsel %vm76, 1, 0
    %v81 = vcvt.s32.f32 %v77
    %v82 = vcvt.s32.f32 %v78
    %v83 = vcvt.s32.f32 %v79
    %v84 = vcvt.s32.f32 %v80
    %v85 = vld [vmem:[%s1] sm:$0xff]
    %v86 = vld [vmem:[%s1 + $0x8] sm:$0xff]
    %v87 = vld [vmem:[%s1 + $0x10] sm:$0xff]
    %v88 = vld [vmem:[%s1 + $0x18] sm:$0xff]
    %v89 = vadd.f32 %v85, %v81
    %v90 = vadd.f32 %v86, %v82
    %v91 = vadd.f32 %v87, %v83
    %v92 = vadd.f32 %v88, %v84
    %v93 = vld [vmem:[%s2] sm:$0xff]
    %v94 = vld [vmem:[%s2 + $0x8] sm:$0xff]
    %v95 = vld [vmem:[%s2 + $0x10] sm:$0xff]
    %v96 = vld [vmem:[%s2 + $0x18] sm:$0xff]
    %v97 = vld [vmem:[%s2 + $0x20] sm:$0xff]
    %v98 = vld [vmem:[%s2 + $0x28] sm:$0xff]
    %v99 = vld [vmem:[%s2 + $0x30] sm:$0xff]
    %v100 = vld [vmem:[%s2 + $0x38] sm:$0xff]
    %v101 = vld [vmem:[%s2 + $0x40] sm:$0xff]
    %v102 = vld [vmem:[%s2 + $0x48] sm:$0xff]
    %v103 = vld [vmem:[%s2 + $0x50] sm:$0xff]
    %v104 = vld [vmem:[%s2 + $0x58] sm:$0xff]
    %v105 = vld [vmem:[%s2 + $0x60] sm:$0xff]
    %v106 = vld [vmem:[%s2 + $0x68] sm:$0xff]
    %v107 = vld [vmem:[%s2 + $0x70] sm:$0xff]
    %v108 = vld [vmem:[%s2 + $0x78] sm:$0xff]
    %109 = vmatprep.subr.mxu0 0.0
    %110 = vmatpush1.msra.mxu0 %v108
    %111 = vmatprep.subr.mxu0 0.0
    %112 = vmatpush1.msra.mxu0 %v107
    %113 = vmatprep.subr.mxu0 0.0
    %114 = vmatpush1.msra.mxu0 %v106
    %115 = vmatprep.subr.mxu0 0.0
    %116 = vmatpush1.msra.mxu0 %v105
    %117 = vmatprep.subr.mxu0 0.0
    %118 = vmatpush1.msra.mxu0 %v104
    %119 = vmatprep.subr.mxu0 0.0
    %120 = vmatpush1.msra.mxu0 %v103
    %121 = vmatprep.subr.mxu0 0.0
    %122 = vmatpush1.msra.mxu0 %v102
    %123 = vmatprep.subr.mxu0 0.0
    %124 = vmatpush1.msra.mxu0 %v101
    %125 = vmatprep.subr.mxu0 0.0
    %126 = vmatpush1.msra.mxu0 %v100
    %127 = vmatprep.subr.mxu0 0.0
    %128 = vmatpush1.msra.mxu0 %v99
    %129 = vmatprep.subr.mxu0 0.0
    %130 = vmatpush1.msra.mxu0 %v98
    %131 = vmatprep.subr.mxu0 0.0
    %132 = vmatpush1.msra.mxu0 %v97
    %133 = vmatprep.subr.mxu0 0.0
    %134 = vmatpush1.msra.mxu0 %v96
    %135 = vmatprep.subr.mxu0 0.0
    %136 = vmatpush1.msra.mxu0 %v95
    %137 = vmatprep.subr.mxu0 0.0
    %138 = vmatpush1.msra.mxu0 %v94
    %139 = vmatprep.subr.mxu0 0.0
    %140 = vmatpush1.msra.mxu0 %v93
    %141 = vmatprep.subr.mxu0 0.0
    %142 = vmatpush2.msra.mxu0 0.0
    %143 = vmatprep.subr.mxu0 0.0
    %144 = vmatpush2.msra.mxu0 0.0
    %145 = vmatprep.subr.mxu0 0.0
    %146 = vmatpush2.msra.mxu0 0.0
    %147 = vmatprep.subr.mxu0 0.0
    %148 = vmatpush2.msra.mxu0 0.0
    %149 = vmatprep.subr.mxu0 0.0
    %150 = vmatpush2.msra.mxu0 0.0
    %151 = vmatprep.subr.mxu0 0.0
    %152 = vmatpush2.msra.mxu0 0.0
    %153 = vmatprep.subr.mxu0 0.0
    %154 = vmatpush2.msra.mxu0 0.0
    %155 = vmatprep.subr.mxu0 0.0
    %156 = vmatpush2.msra.mxu0 0.0
    %157 = vmatprep.subr.mxu0 0.0
    %158 = vmatpush2.msra.mxu0 0.0
    %159 = vmatprep.subr.mxu0 0.0
    %160 = vmatpush2.msra.mxu0 0.0
    %161 = vmatprep.subr.mxu0 0.0
    %162 = vmatpush2.msra.mxu0 0.0
    %163 = vmatprep.subr.mxu0 0.0
    %164 = vmatpush2.msra.mxu0 0.0
    %165 = vmatprep.subr.mxu0 0.0
    %166 = vmatpush2.msra.mxu0 0.0
    %167 = vmatprep.subr.mxu0 0.0
    %168 = vmatpush2.msra.mxu0 0.0
    %169 = vmatprep.subr.mxu0 0.0
    %170 = vmatpush2.msra.mxu0 0.0
    %171 = vmatprep.subr.mxu0 0.0
    %172 = vmatpush2.msra.mxu0 0.0
    %173 = vmatprep.mubr.f32.mxu0 0.0
    %174 = vmatmul.mubr.f32.gmra.mxu0 %v89
    %v175 = vpop.f32.mrf.mxu0
    %v176 = vadd.f32 0.0, %v175
    %v177 = vpop.f32.mrf.mxu0
    %178 = vmatprep.mubr.f32.mxu0 0.0
    %179 = vmatmul.mubr.f32.gmra.mxu0 %v90
    %v180 = vpop.f32.mrf.mxu0
    %v181 = vadd.f32 0.0, %v180
    %v182 = vpop.f32.mrf.mxu0
    %183 = vmatprep.mubr.f32.mxu0 0.0
    %184 = vmatmul.mubr.f32.gmra.mxu0 %v91
    %v185 = vpop.f32.mrf.mxu0
    %v186 = vadd.f32 0.0, %v185
    %v187 = vpop.f32.mrf.mxu0
    %188 = vmatprep.mubr.f32.mxu0 0.0
    %189 = vmatmul.mubr.f32.gmra.mxu0 %v92
    %v190 = vpop.f32.mrf.mxu0
    %v191 = vadd.f32 0.0, %v190
    %v192 = vpop.f32.mrf.mxu0
    %193 = vdwg.mxu0
    %194 = vst [vmem:[#allocation2] sm:$0xff] %v176
    %195 = vst [vmem:[#allocation2 + $0x8] sm:$0xff] %v181
    %196 = vst [vmem:[#allocation2 + $0x10] sm:$0xff] %v186
    %197 = vst [vmem:[#allocation2 + $0x18] sm:$0xff] %v191
    // Predicated region
    $region14: #{forward.1} parent=1 // pred_check
      _
    $region15: #{forward.1} parent=1 // pred_check_branch
      %199 = sbr.rel (0) target = $region17
    $region16: #{forward.1} parent=1 // pred_region
      %s201 = ssub.s32 512, 512
      %202 = vsyncadd [#allocation3], %s201
      %s203 = sshll.u32 [#allocation2], 4
      %s204 = int_to_ptr.vmem [resolvable:$true] %s203
      %209 = dma.vmem_to_hbm [thread:$0]  %s204, 512, %s3, [#allocation3], 128, 128, 8
    $region17: #{forward.1} parent=1 // pred_fallthru
      _
    // Predicated region
    $region18: #{forward.1} parent=1 // pred_check
      _
    $region19: #{forward.1} parent=1 // pred_check_branch
      %211 = sbr.rel (0) target = $region21
    $region20: #{forward.1} parent=1 // pred_region
      %212 = dma.done [#allocation3], 512
    $region21: #{forward.1} parent=1 // pred_fallthru
      _
    %213 = vsyncpa [#allocation3], 1

</llo_original>
